<compile_context>
chip_gen: v7x
topology: tpu7x:2x2x1
jax: 0.10.0
libtpu: 0.0.40
codegen_flags: <defaults>
</compile_context>

<pallas_src>
import functools

import jax
import jax.numpy as jnp
from jax.experimental import pallas as pl
from jax.experimental.pallas import tpu as pltpu

EPS = 1e-3               # BatchNorm2d eps used by the module
_LANE = 128
_MAX_TILE_LANES = 16     # spatial tile of up to 16*128 = 2048 output positions


def _stats_kernel(p_ref, w_ref, stats_ref):
    """Pass 1: conv tile + per-tile partial BN statistics.

    p_ref     : (1, K, Mt)     bf16  im2col patches, K = 9*Cin, lanes = spatial
    w_ref     : (Cout, K)      bf16
    stats_ref : (1, 1, Cout, 2) f32  [sum, sum of squares] per channel
    """
    conv = jnp.dot(w_ref[...], p_ref[0],
                   preferred_element_type=jnp.float32)        # (Cout, Mt) f32
    s1 = jnp.sum(conv, axis=-1, keepdims=True)                # lane reduce (XLU)
    s2 = jnp.sum(conv * conv, axis=-1, keepdims=True)
    stats_ref[0, 0] = jnp.concatenate([s1, s2], axis=-1)      # (Cout, 2)


def _bn_hswish_kernel(p_ref, w_ref, ss_ref, o_ref):
    """Pass 2: recompute conv tile, fused affine BN + Hardswish, NCHW store."""
    conv = jnp.dot(w_ref[...], p_ref[0],
                   preferred_element_type=jnp.float32)        # (Cout, Mt) f32
    scale = ss_ref[:, 0:1]                                    # (Cout, 1)
    shift = ss_ref[:, 1:2]
    bn = conv * scale + shift
    # Hardswish: x * relu6(x + 3) / 6  (f32 epilogue, v5e-safe)
    o_ref[0] = bn * jnp.clip(bn + 3.0, 0.0, 6.0) * (1.0 / 6.0)


def _cdiv(a, b):
    return -(-a // b)


@functools.partial(jax.jit, static_argnames=("stride", "padding"))
def std_conv_pallas(x_nchw, weight, gamma, beta, *, stride=2, padding=1):
    """x_nchw: (N, Cin, H, W) f32; weight: (Cout, Cin, KH, KW) [PyTorch OIHW]."""
    N, Cin, H, W = x_nchw.shape
    Cout, _, KH, KW = weight.shape
    if not (stride == 2 and KH == 3 and KW == 3 and padding == 1):
        raise NotImplementedError(
            "kernel is specialised to the module's k=3 / s=2 / p=1 configuration")

    Ho = (H + 2 * padding - KH) // stride + 1
    Wo = (W + 2 * padding - KW) // stride + 1
    M = Ho * Wo
    K = Cin * KH * KW

    # Spatial tile: lane-dense multiple of 128, <= 2048 positions, minimal pad.
    lane_groups = _cdiv(M, _LANE)
    grid_m = _cdiv(lane_groups, _MAX_TILE_LANES)
    Mt = _cdiv(lane_groups, grid_m) * _LANE
    M_pad = Mt * grid_m

    # ---- wrapper packing: padded NCHW -> (N, 9*Cin, M_pad) bf16 patches ----
    xp = jnp.pad(x_nchw, ((0, 0), (0, 0),
                          (padding, padding), (padding, padding)))
    taps = []
    for kh in range(KH):
        for kw in range(KW):
            taps.append(xp[:, :, kh::stride, kw::stride][:, :, :Ho, :Wo])
    patches = jnp.stack(taps, axis=2).reshape(N, K, M)   # k = ci*9 + kh*3 + kw
    patches = jnp.pad(patches, ((0, 0), (0, 0), (0, M_pad - M)))
    patches = patches.astype(jnp.bfloat16)

    w2 = weight.reshape(Cout, K).astype(jnp.bfloat16)    # matches patch k order

    p_spec = pl.BlockSpec((1, K, Mt), lambda n, m: (n, 0, m))
    w_spec = pl.BlockSpec((Cout, K), lambda n, m: (0, 0))
    cparams = pltpu.CompilerParams(
        dimension_semantics=("parallel", "parallel"))    # both axes megacore-safe

    # ---- pass 1: per-tile partial (sum, sum of squares) of the conv ----
    stats = pl.pallas_call(
        _stats_kernel,
        out_shape=jax.ShapeDtypeStruct((N, grid_m, Cout, 2), jnp.float32),
        grid_spec=pltpu.PrefetchScalarGridSpec(
            num_scalar_prefetch=0, grid=(N, grid_m),
            in_specs=[p_spec, w_spec],
            out_specs=pl.BlockSpec((1, 1, Cout, 2), lambda n, m: (n, m, 0, 0))),
        compiler_params=cparams,
    )(patches, w2)

    # ---- combine stats, fold BN into one per-channel affine (f32) ----
    # Zero-padded spatial columns contribute exactly 0 to both sums, so the
    # statistics over the true N*Ho*Wo count are exact.
    # TODO(synk): E[x^2]-E[x]^2 in f32 can understate variance when
    # |mean| >> std; a Welford-style per-tile combine would be more robust.
    tot = jnp.sum(stats, axis=(0, 1))                    # (Cout, 2)
    cnt = N * M
    mean = tot[:, 0] / cnt
    var = jnp.maximum(tot[:, 1] / cnt - mean * mean, 0.0)
    scale = gamma.astype(jnp.float32) * jax.lax.rsqrt(var + EPS)
    shift = beta.astype(jnp.float32) - mean * scale
    ss = jnp.stack([scale, shift], axis=-1)              # (Cout, 2) f32

    # ---- pass 2: recompute conv tile, fused BN affine + Hardswish ----
    out = pl.pallas_call(
        _bn_hswish_kernel,
        out_shape=jax.ShapeDtypeStruct((N, Cout, M_pad), jnp.float32),
        grid_spec=pltpu.PrefetchScalarGridSpec(
            num_scalar_prefetch=0, grid=(N, grid_m),
            in_specs=[p_spec, w_spec,
                      pl.BlockSpec((Cout, 2), lambda n, m: (0, 0))],
            out_specs=pl.BlockSpec((1, Cout, Mt), lambda n, m: (n, 0, m))),
        compiler_params=cparams,
    )(patches, w2, ss)

    # TODO(synk): BatchNorm running_mean/running_var update (momentum=0.01) is
    # module training state, not part of the forward tensor; not emitted here.

    out = out[:, :, :M].reshape(N, Cout, Ho, Wo)         # already NCHW
    return out.astype(x_nchw.dtype)


def std_conv_ref(x_nchw, weight, gamma, beta, *, stride=2, padding=1):
    """Pure-JAX f32 reference (same semantics) for a sanity check."""
    conv = jax.lax.conv_general_dilated(
        x_nchw, weight, (stride, stride),
        ((padding, padding), (padding, padding)),
        dimension_numbers=("NCHW", "OIHW", "NCHW"),
    )
    mean = jnp.mean(conv, axis=(0, 2, 3), keepdims=True)
    var = jnp.mean((conv - mean) ** 2, axis=(0, 2, 3), keepdims=True)
    bn = (conv - mean) * jax.lax.rsqrt(var + EPS)
    bn = bn * gamma.reshape(1, -1, 1, 1) + beta.reshape(1, -1, 1, 1)
    return bn * jnp.clip(bn + 3.0, 0.0, 6.0) / 6.0


if __name__ == "__main__":
    key = jax.random.PRNGKey(0)
    kx, kw = jax.random.split(key)

    N, Cin, H, W = 2, 4, 16, 16
    Cout, KH, KW = 8, 3, 3

    x = jax.random.normal(kx, (N, Cin, H, W), dtype=jnp.float32)
    weight = jax.random.normal(kw, (Cout, Cin, KH, KW), dtype=jnp.float32) * 0.2
    gamma = 1.0 + 0.1 * jnp.arange(Cout, dtype=jnp.float32)
    beta = 0.05 * jnp.arange(Cout, dtype=jnp.float32)

    y = jax.block_until_ready(std_conv_pallas(x, weight, gamma, beta))
    assert y.shape == (N, Cout, H // 2, W // 2), y.shape

    # Reference with the same intentional bf16 rounding of the matmul inputs
    # (isolates structural correctness from the deliberate MXU quantization).
    xq = x.astype(jnp.bfloat16).astype(jnp.float32)
    wq = weight.astype(jnp.bfloat16).astype(jnp.float32)
    y_bf16 = std_conv_ref(xq, wq, gamma, beta)
    assert jnp.max(jnp.abs(y - y_bf16)) < 2e-2, float(jnp.max(jnp.abs(y - y_bf16)))

    # Pure f32 module semantics (looser bound: bf16 conv inputs).
    y_f32 = std_conv_ref(x, weight, gamma, beta)
    assert jnp.max(jnp.abs(y - y_f32)) < 1e-1, float(jnp.max(jnp.abs(y - y_f32)))

    print("KERNEL_OK")
</pallas_src>

<mosaic_0001>
module attributes {stable_mosaic.version = 11 : i64} {
  func.func @_stats_kernel(%arg0: i32, %arg1: i32, %arg2: memref<1x36x128xbf16, #tpu.memory_space<vmem>>, %arg3: memref<8x36xbf16, #tpu.memory_space<vmem>>, %arg4: memref<1x1x8x2xf32, #tpu.memory_space<vmem>>) attributes {dimension_semantics = [#tpu.dimension_semantics<parallel>, #tpu.dimension_semantics<parallel>], iteration_bounds = array<i64: 2, 1>, scalar_prefetch = 0 : i64, scratch_operands = 0 : i64, tpu.core_type = #tpu.core_type<tc>, window_params = [{transform_indices = @transform_0, window_bounds = array<i64: 1, 36, 128>}, {pipeline_mode = #tpu.pipeline_mode<synchronous>, transform_indices = @transform_1, window_bounds = array<i64: 8, 36>}, {transform_indices = @transform_2, window_bounds = array<i64: 1, 1, 8, 2>}]} {
    %c0 = arith.constant 0 : index
    %c0_0 = arith.constant 0 : index
    %0 = vector.load %arg3[%c0, %c0_0] : memref<8x36xbf16, #tpu.memory_space<vmem>>, vector<8x36xbf16>
    %c0_1 = arith.constant 0 : index
    %c0_2 = arith.constant 0 : index
    %c0_3 = arith.constant 0 : index
    %1 = vector.load %arg2[%c0_1, %c0_2, %c0_3] : memref<1x36x128xbf16, #tpu.memory_space<vmem>>, vector<1x36x128xbf16>
    %2 = vector.shape_cast %1 : vector<1x36x128xbf16> to vector<36x128xbf16>
    %cst = arith.constant dense<0.000000e+00> : vector<8x128xf32>
    %3 = tpu.matmul %0, %2, %cst {dimension_numbers = #tpu.dot_dimension_numbers<[1], [0], [0], [1], [0, 0, 1, 1], [], []>} : vector<8x36xbf16>, vector<36x128xbf16>, vector<8x128xf32> -> vector<8x128xf32>
    %cst_4 = arith.constant dense<0.000000e+00> : vector<8xf32>
    %4 = vector.multi_reduction <add>, %3, %cst_4 [1] : vector<8x128xf32> to vector<8xf32>
    %5 = vector.shape_cast %4 : vector<8xf32> to vector<8x1xf32>
    %6 = arith.mulf %3, %3 : vector<8x128xf32>
    %cst_5 = arith.constant dense<0.000000e+00> : vector<8xf32>
    %7 = vector.multi_reduction <add>, %6, %cst_5 [1] : vector<8x128xf32> to vector<8xf32>
    %8 = vector.shape_cast %7 : vector<8xf32> to vector<8x1xf32>
    %9 = tpu.concatenate %5, %8 in 1 : vector<8x1xf32>, vector<8x1xf32> -> vector<8x2xf32>
    %c0_6 = arith.constant 0 : index
    %c0_7 = arith.constant 0 : index
    %c0_8 = arith.constant 0 : index
    %c0_9 = arith.constant 0 : index
    %10 = vector.load %arg4[%c0_6, %c0_7, %c0_8, %c0_9] : memref<1x1x8x2xf32, #tpu.memory_space<vmem>>, vector<1x1x8x2xf32>
    %11 = vector.shape_cast %10 : vector<1x1x8x2xf32> to vector<8x2xf32>
    %12 = vector.shape_cast %9 : vector<8x2xf32> to vector<1x1x8x2xf32>
    tpu.vector_store %arg4[%c0_6, %c0_7, %c0_8, %c0_9], %12 {strides = array<i32>} : memref<1x1x8x2xf32, #tpu.memory_space<vmem>>, vector<1x1x8x2xf32>,
    return
  }
  func.func @transform_0(%arg0: i32, %arg1: i32) -> (i32, i32, i32) {
    %c0_i32 = arith.constant 0 : i32
    %c0_i32_0 = arith.constant 0 : i32
    return %arg0, %c0_i32, %arg1 : i32, i32, i32
  }
  func.func @transform_1(%arg0: i32, %arg1: i32) -> (i32, i32) {
    %c0_i32 = arith.constant 0 : i32
    %c0_i32_0 = arith.constant 0 : i32
    %c0_i32_1 = arith.constant 0 : i32
    return %c0_i32, %c0_i32_0 : i32, i32
  }
  func.func @transform_2(%arg0: i32, %arg1: i32) -> (i32, i32, i32, i32) {
    %c0_i32 = arith.constant 0 : i32
    %c0_i32_0 = arith.constant 0 : i32
    %c0_i32_1 = arith.constant 0 : i32
    return %arg0, %arg1, %c0_i32, %c0_i32_0 : i32, i32, i32, i32
  }
}

module attributes {stable_mosaic.version = 11 : i64} {
  func.func @_bn_hswish_kernel(%arg0: i32, %arg1: i32, %arg2: memref<1x36x128xbf16, #tpu.memory_space<vmem>>, %arg3: memref<8x36xbf16, #tpu.memory_space<vmem>>, %arg4: memref<8x2xf32, #tpu.memory_space<vmem>>, %arg5: memref<1x8x128xf32, #tpu.memory_space<vmem>>) attributes {dimension_semantics = [#tpu.dimension_semantics<parallel>, #tpu.dimension_semantics<parallel>], iteration_bounds = array<i64: 2, 1>, scalar_prefetch = 0 : i64, scratch_operands = 0 : i64, tpu.core_type = #tpu.core_type<tc>, window_params = [{transform_indices = @transform_0, window_bounds = array<i64: 1, 36, 128>}, {pipeline_mode = #tpu.pipeline_mode<synchronous>, transform_indices = @transform_1, window_bounds = array<i64: 8, 36>}, {pipeline_mode = #tpu.pipeline_mode<synchronous>, transform_indices = @transform_2, window_bounds = array<i64: 8, 2>}, {transform_indices = @transform_3, window_bounds = array<i64: 1, 8, 128>}]} {
    %c0 = arith.constant 0 : index
    %c0_0 = arith.constant 0 : index
    %0 = vector.load %arg3[%c0, %c0_0] : memref<8x36xbf16, #tpu.memory_space<vmem>>, vector<8x36xbf16>
    %c0_1 = arith.constant 0 : index
    %c0_2 = arith.constant 0 : index
    %c0_3 = arith.constant 0 : index
    %1 = vector.load %arg2[%c0_1, %c0_2, %c0_3] : memref<1x36x128xbf16, #tpu.memory_space<vmem>>, vector<1x36x128xbf16>
    %2 = vector.shape_cast %1 : vector<1x36x128xbf16> to vector<36x128xbf16>
    %cst = arith.constant dense<0.000000e+00> : vector<8x128xf32>
    %3 = tpu.matmul %0, %2, %cst {dimension_numbers = #tpu.dot_dimension_numbers<[1], [0], [0], [1], [0, 0, 1, 1], [], []>} : vector<8x36xbf16>, vector<36x128xbf16>, vector<8x128xf32> -> vector<8x128xf32>
    %c0_4 = arith.constant 0 : index
    %c0_5 = arith.constant 0 : index
    %4 = vector.load %arg4[%c0_4, %c0_5] : memref<8x2xf32, #tpu.memory_space<vmem>>, vector<8x1xf32>
    %c0_6 = arith.constant 0 : index
    %c1 = arith.constant 1 : index
    %5 = vector.load %arg4[%c0_6, %c1] : memref<8x2xf32, #tpu.memory_space<vmem>>, vector<8x1xf32>
    %6 = vector.broadcast %4 : vector<8x1xf32> to vector<8x128xf32>
    %7 = arith.mulf %3, %6 : vector<8x128xf32>
    %8 = vector.broadcast %5 : vector<8x1xf32> to vector<8x128xf32>
    %9 = arith.addf %7, %8 : vector<8x128xf32>
    %cst_7 = arith.constant 3.000000e+00 : f32
    %10 = vector.broadcast %cst_7 : f32 to vector<8x128xf32>
    %11 = arith.addf %9, %10 : vector<8x128xf32>
    %cst_8 = arith.constant 0.000000e+00 : f32
    %cst_9 = arith.constant 6.000000e+00 : f32
    %12 = vector.broadcast %cst_8 : f32 to vector<8x128xf32>
    %13 = arith.maximumf %12, %11 : vector<8x128xf32>
    %14 = vector.broadcast %cst_9 : f32 to vector<8x128xf32>
    %15 = arith.minimumf %14, %13 : vector<8x128xf32>
    %16 = arith.mulf %9, %15 : vector<8x128xf32>
    %cst_10 = arith.constant 0.166666672 : f32
    %17 = vector.broadcast %cst_10 : f32 to vector<8x128xf32>
    %18 = arith.mulf %16, %17 : vector<8x128xf32>
    %c0_11 = arith.constant 0 : index
    %c0_12 = arith.constant 0 : index
    %c0_13 = arith.constant 0 : index
    %19 = vector.load %arg5[%c0_11, %c0_12, %c0_13] : memref<1x8x128xf32, #tpu.memory_space<vmem>>, vector<1x8x128xf32>
    %20 = vector.shape_cast %19 : vector<1x8x128xf32> to vector<8x128xf32>
    %21 = vector.shape_cast %18 : vector<8x128xf32> to vector<1x8x128xf32>
    tpu.vector_store %arg5[%c0_11, %c0_12, %c0_13], %21 {strides = array<i32>} : memref<1x8x128xf32, #tpu.memory_space<vmem>>, vector<1x8x128xf32>,
    return
  }
  func.func @transform_0(%arg0: i32, %arg1: i32) -> (i32, i32, i32) {
    %c0_i32 = arith.constant 0 : i32
    %c0_i32_0 = arith.constant 0 : i32
    return %arg0, %c0_i32, %arg1 : i32, i32, i32
  }
  func.func @transform_1(%arg0: i32, %arg1: i32) -> (i32, i32) {
    %c0_i32 = arith.constant 0 : i32
    %c0_i32_0 = arith.constant 0 : i32
    %c0_i32_1 = arith.constant 0 : i32
    return %c0_i32, %c0_i32_0 : i32, i32
  }
  func.func @transform_2(%arg0: i32, %arg1: i32) -> (i32, i32) {
    %c0_i32 = arith.constant 0 : i32
    %c0_i32_0 = arith.constant 0 : i32
    %c0_i32_1 = arith.constant 0 : i32
    return %c0_i32, %c0_i32_0 : i32, i32
  }
  func.func @transform_3(%arg0: i32, %arg1: i32) -> (i32, i32, i32) {
    %c0_i32 = arith.constant 0 : i32
    %c0_i32_0 = arith.constant 0 : i32
    return %arg0, %c0_i32, %arg1 : i32, i32, i32
  }
}

</mosaic_0001>

<llo_original>
// kernel: std_conv_pallas.3
$region0: #{std_conv_pallas.3}
  #allocation0 [shape = 'u32[]', space=smem, size = 0x4, offset = 0x4, fixed_abs, tag = 'smem constant byte address 0x4 - core index']
  #allocation1 [shape = 'u32[144,128]{1,0:T(1,128)}', space=vmem, size = 0x12000, scoped, tag = 'internal scratch']
  %s0 = inlined_call_operand.vmem [shape: bf16[2,36,128], index: 0, kind: input, shape index: {}]
  %s1 = inlined_call_operand.vmem [shape: bf16[8,36], index: 1, kind: input, shape index: {}]
  %s2 = inlined_call_operand.vmem [shape: f32[8,2], index: 2, kind: input, shape index: {}]
  %s3 = inlined_call_operand.vmem [shape: f32[2,8,128], index: 3, kind: output, shape index: {}]
  %s4 = sld [smem:[#allocation0]]
  $region45: #{std_conv_pallas.3} parent=0
    _
  %s6 = ssub.s32 1, %s4
  %s7 = scalar_select 0, %s6, %s4
  loop: start=0, step=1, limit=4
  $region2: #{std_conv_pallas.3} parent=0 // loop_pre_header
    _
  $region3: #{std_conv_pallas.3} parent=0 // loop_header
    %s9 = sphi 0, %s13
    %p10 = scmp.ge.s32.totalorder %s9, 4
    %s16 = sphi 0, %s28
    %s17 = sphi 0, %s24
    %s18 = sphi 0, %s16
    %s19 = sphi 0, %s17
    %s20 = sphi 0, %s18
    %s21 = sphi 0, %s19
    %s33 = sphi 0, %s35
    %s36 = sphi 0, %s33
    %s37 = sphi 0, %s36
    %s53 = sphi 0, %s37
    %s57 = sphi 0, %s57
    %s59 = sphi 0, %s57
    %s60 = sphi 0, %s59
    %s74 = sphi 0, %s60
    %s78 = sphi 0, %s78
    %s80 = sphi 0, %s78
    %s81 = sphi 0, %s80
    %s95 = sphi 0, %s81
    %s103 = sphi 0, %s105
    %s106 = sphi 0, %s103
    %s107 = sphi 0, %s106
    %s123 = sphi 0, %s107
  $region4: #{std_conv_pallas.3} parent=0 // loop_header_branch
    %12 = sbr.rel (%p10) target = $region8
  $region5: #{std_conv_pallas.3} parent=0 // loop_body
    %s14 = ssub.s32 %s9, 1
    %s15 = ssub.s32 %s9, 2
    %s22 = sadd.s32 1, %s17
    %p23 = scmp.ge.s32.totalorder %s22, 1
    %s24 = scalar_select %p23, 0, %s22
    %s25 = sadd.s32 1, %s16
    %s26 = scalar_select %p23, %s25, %s16
    %p27 = scmp.ge.s32.totalorder %s26, 2
    %s28 = scalar_select %p27, 0, %s26
    %s29 = ssub.s32 %s16, %s28
    %s30 = ssub.s32 %s17, %s24
    %s31 = sor.u32 %s29, %s30
    %p32 = scmp.eq.s32.totalorder %s31, 0
    %s34 = sadd.s32 %s33, 1
    %s35 = scalar_select %p32, %s33, %s34
    %p38 = pneg %p32
    %p39 = scmp.eq.s32.totalorder %s9, 1
    %p40 = por %p38, %p39
    %p41 = scmp.ne.s32.totalorder %s33, %s36
    %p42 = scmp.eq.s32.totalorder %s9, 0
    %p43 = por %p41, %p42
    %p44 = scmp.ne.s32.totalorder %s33, %s36
    %p45 = scmp.eq.s32.totalorder %s14, 1
    %p46 = por %p44, %p45
    %p47 = scmp.ne.s32.totalorder %s36, %s37
    %p48 = scmp.eq.s32.totalorder %s14, 0
    %p49 = por %p47, %p48
    %p50 = scmp.ne.s32.totalorder %s36, %s37
    %p51 = scmp.eq.s32.totalorder %s15, 1
    %p52 = por %p50, %p51
    %p54 = scmp.ne.s32.totalorder %s37, %s53
    %p55 = scmp.eq.s32.totalorder %s15, 0
    %p56 = por %p54, %p55
    %s58 = sadd.s32 %s57, 1
    %p61 = scmp.eq.s32.totalorder %s9, 1
    %p62 = scmp.ne.s32.totalorder %s57, %s59
    %p63 = scmp.eq.s32.totalorder %s9, 0
    %p64 = por %p62, %p63
    %p65 = scmp.ne.s32.totalorder %s57, %s59
    %p66 = scmp.eq.s32.totalorder %s14, 1
    %p67 = por %p65, %p66
    %p68 = scmp.ne.s32.totalorder %s59, %s60
    %p69 = scmp.eq.s32.totalorder %s14, 0
    %p70 = por %p68, %p69
    %p71 = scmp.ne.s32.totalorder %s59, %s60
    %p72 = scmp.eq.s32.totalorder %s15, 1
    %p73 = por %p71, %p72
    %p75 = scmp.ne.s32.totalorder %s60, %s74
    %p76 = scmp.eq.s32.totalorder %s15, 0
    %p77 = por %p75, %p76
    %s79 = sadd.s32 %s78, 1
    %p82 = scmp.eq.s32.totalorder %s9, 1
    %p83 = scmp.ne.s32.totalorder %s78, %s80
    %p84 = scmp.eq.s32.totalorder %s9, 0
    %p85 = por %p83, %p84
    %p86 = scmp.ne.s32.totalorder %s78, %s80
    %p87 = scmp.eq.s32.totalorder %s14, 1
    %p88 = por %p86, %p87
    %p89 = scmp.ne.s32.totalorder %s80, %s81
    %p90 = scmp.eq.s32.totalorder %s14, 0
    %p91 = por %p89, %p90
    %p92 = scmp.ne.s32.totalorder %s80, %s81
    %p93 = scmp.eq.s32.totalorder %s15, 1
    %p94 = por %p92, %p93
    %p96 = scmp.ne.s32.totalorder %s81, %s95
    %p97 = scmp.eq.s32.totalorder %s15, 0
    %p98 = por %p96, %p97
    %s99 = ssub.s32 %s16, %s28
    %s100 = ssub.s32 %s17, %s24
    %s101 = sor.u32 %s99, %s100
    %p102 = scmp.eq.s32.totalorder %s101, 0
    %s104 = sadd.s32 %s103, 1
    %s105 = scalar_select %p102, %s103, %s104
    %p108 = pneg %p102
    %p109 = scmp.eq.s32.totalorder %s9, 1
    %p110 = por %p108, %p109
    %p111 = scmp.ne.s32.totalorder %s103, %s106
    %p112 = scmp.eq.s32.totalorder %s9, 0
    %p113 = por %p111, %p112
    %p114 = scmp.ne.s32.totalorder %s103, %s106
    %p115 = scmp.eq.s32.totalorder %s14, 1
    %p116 = por %p114, %p115
    %p117 = scmp.ne.s32.totalorder %s106, %s107
    %p118 = scmp.eq.s32.totalorder %s14, 0
    %p119 = por %p117, %p118
    %p120 = scmp.ne.s32.totalorder %s106, %s107
    %p121 = scmp.eq.s32.totalorder %s15, 1
    %p122 = por %p120, %p121
    %p124 = scmp.ne.s32.totalorder %s107, %s123
    %p125 = scmp.eq.s32.totalorder %s15, 0
    %p126 = por %p124, %p125
    %p127 = scmp.le.s32.totalorder 1, %s9
    %p128 = scmp.lt.s32.totalorder %s9, 3
    %p129 = pnand %p127, %p128
    %p130 = pneg %p129
    // Predicated region
    $region9: #{std_conv_pallas.3} parent=5 // pred_check
      _
    $region10: #{std_conv_pallas.3} parent=5 // pred_check_branch
      %132 = sbr.rel (%p129) target = $region12
    $region11: #{std_conv_pallas.3} parent=5 // pred_region
      %s133 = ssub.s32 %s9, 1
      // Predicated region
      $region13: #{std_conv_pallas.3} parent=11 // pred_check
        %p134 = pneg %p70
      $region14: #{std_conv_pallas.3} parent=11 // pred_check_branch
        %136 = sbr.rel (%p134) target = $region16
      $region15: #{std_conv_pallas.3} parent=11 // pred_region
        _
      $region16: #{std_conv_pallas.3} parent=11 // pred_fallthru
        _
      // Predicated region
      $region17: #{std_conv_pallas.3} parent=11 // pred_check
        %p137 = pneg %p91
      $region18: #{std_conv_pallas.3} parent=11 // pred_check_branch
        %139 = sbr.rel (%p137) target = $region20
      $region19: #{std_conv_pallas.3} parent=11 // pred_region
        _
      $region20: #{std_conv_pallas.3} parent=11 // pred_fallthru
        _
    $region12: #{std_conv_pallas.3} parent=5 // pred_fallthru
      _
    %p140 = scmp.lt.s32.totalorder %s9, 2
    // Predicated region
    $region21: #{std_conv_pallas.3} parent=5 // pred_check
      %p141 = pneg %p140
    $region22: #{std_conv_pallas.3} parent=5 // pred_check_branch
      %143 = sbr.rel (%p141) target = $region24
    $region23: #{std_conv_pallas.3} parent=5 // pred_region
      // Predicated region
      $region25: #{std_conv_pallas.3} parent=23 // pred_check
        %p144 = pneg %p43
      $region26: #{std_conv_pallas.3} parent=23 // pred_check_branch
        %146 = sbr.rel (%p144) target = $region28
      $region27: #{std_conv_pallas.3} parent=23 // pred_region
        %p147 = scmp.lt.s32.totalorder %s16, 1
        %s148 = scalar_select %p147, %s16, 1
        %p149 = scmp.lt.s32.totalorder %s17, 0
        %s150 = scalar_select %p149, %s17, 0
        %s151 = smul.addr %s148, 5
        %s152 = sadd.s32 %s150, %s151
        %s153 = smul.addr %s152, 4
        %s154 = scalar_lea.vmem %s0, %s153
      $region28: #{std_conv_pallas.3} parent=23 // pred_fallthru
        _
    $region24: #{std_conv_pallas.3} parent=5 // pred_fallthru
      _
    %p155 = scmp.le.s32.totalorder 1, %s9
    %p156 = scmp.lt.s32.totalorder %s9, 3
    %p157 = pnand %p155, %p156
    %p158 = pneg %p157
    // Predicated region
    $region29: #{std_conv_pallas.3} parent=5 // pred_check
      _
    $region30: #{std_conv_pallas.3} parent=5 // pred_check_branch
      %160 = sbr.rel (%p157) target = $region32
    $region31: #{std_conv_pallas.3} parent=5 // pred_region
      %s161 = ssub.s32 %s9, 1
      %p162 = scmp.lt.s32.totalorder %s18, 1
      %s163 = scalar_select %p162, %s18, 1
      %p164 = scmp.lt.s32.totalorder %s19, 0
      %s165 = scalar_select %p164, %s19, 0
      %s166 = smul.addr %s163, 5
      %s167 = sadd.s32 %s165, %s166
      %s168 = smul.addr %s167, 4
      %s169 = scalar_lea.vmem %s0, %s168
      %p170 = pneg %p49
      %p171 = pneg %p46
      %p172 = pneg %p70
      %p173 = pneg %p67
      %p174 = pneg %p91
      %p175 = pneg %p88
      %p176 = pneg %p119
      %p177 = pneg %p116
      %p178 = scmp.lt.s32.totalorder %s18, 1
      %s179 = scalar_select %p178, %s18, 1
      %p180 = scmp.lt.s32.totalorder %s19, 0
      %s181 = scalar_select %p180, %s19, 0
      %s182 = sadd.s32 %s181, %s179
      %s183 = smul.addr %s182, 8
      %s184 = scalar_lea.vmem %s3, %s183
      %p185 = scmp.lt.s32.totalorder %s18, 1
      %s186 = scalar_select %p185, %s18, 1
      %p187 = scmp.lt.s32.totalorder %s19, 0
      %s188 = scalar_select %p187, %s19, 0
      %s189 = smul.addr %s186, 5
      %s190 = sadd.s32 %s188, %s189
      %s191 = smul.addr %s190, 4
      %s192 = scalar_lea.vmem %s0, %s191
      %p193 = scmp.lt.s32.totalorder %s18, 1
      %s194 = scalar_select %p193, %s18, 1
      %p195 = scmp.lt.s32.totalorder %s19, 0
      %s196 = scalar_select %p195, %s19, 0
      %s197 = sadd.s32 %s196, %s194
      %s198 = smul.addr %s197, 8
      %s199 = scalar_lea.vmem %s3, %s198
      %v201 = vld [vmem:[%s1] sm:$0xf]
      %v202 = vld [vmem:[%s192] sm:$0xf]
      %v203 = vld [vmem:[%s192 + $0x4] sm:$0xf]
      %v204 = vld [vmem:[%s192 + $0x8] sm:$0xf]
      %v205 = vld [vmem:[%s192 + $0xc] sm:$0xf]
      %v206 = vld [vmem:[%s192 + $0x10] sm:$0x3]
      %v212 = vunpack.c.l.b16 %v202
      %v213 = vunpack.c.l.b16 %v203
      %v214 = vunpack.c.l.b16 %v204
      %v215 = vunpack.c.l.b16 %v205
      %v216 = vunpack.c.l.b16 %v206
      %v217 = vpack.c.b16 %v213, %v212
      %v218 = vpack.c.b16 %v215, %v214
      %v219 = vpack.c.b16 %v216, %v216
      %vm222 = vcmask 293888
      %v224 = vsel %vm222, %v201, 0
      %vm226 = vcmask 1041408
      %v228 = vsel %vm226, %v219, 0
      %230 = vmatprep.subr.bf16.mxu0 0
      %231 = vmatpush1.bf16.msra.mxu0 %v217
      %232 = vmatprep.subr.bf16.mxu0 0
      %233 = vmatpush1.bf16.msra.mxu0 %v218
      %234 = vmatprep.subr.bf16.mxu0 0
      %235 = vmatpush1.bf16.msra.mxu0 %v228
      %236 = vmatprep.subr.bf16.mxu0 0
      %237 = vmatpush1.bf16.msra.mxu0 0
      %238 = vmatprep.subr.bf16.mxu0 0
      %239 = vmatpush1.bf16.msra.mxu0 0
      %240 = vmatprep.subr.bf16.mxu0 0
      %241 = vmatpush1.bf16.msra.mxu0 0
      %242 = vmatprep.subr.bf16.mxu0 0
      %243 = vmatpush1.bf16.msra.mxu0 0
      %244 = vmatprep.subr.bf16.mxu0 0
      %245 = vmatpush1.bf16.msra.mxu0 0
      %246 = vmatprep.subr.bf16.mxu0 0
      %247 = vmatpush1.bf16.msra.mxu0 0
      %248 = vmatprep.subr.bf16.mxu0 0
      %249 = vmatpush1.bf16.msra.mxu0 0
      %250 = vmatprep.subr.bf16.mxu0 0
      %251 = vmatpush1.bf16.msra.mxu0 0
      %252 = vmatprep.subr.bf16.mxu0 0
      %253 = vmatpush1.bf16.msra.mxu0 0
      %254 = vmatprep.subr.bf16.mxu0 0
      %255 = vmatpush1.bf16.msra.mxu0 0
      %256 = vmatprep.subr.bf16.mxu0 0
      %257 = vmatpush1.bf16.msra.mxu0 0
      %258 = vmatprep.subr.bf16.mxu0 0
      %259 = vmatpush1.bf16.msra.mxu0 0
      %260 = vmatprep.subr.bf16.mxu0 0
      %261 = vmatpush1.bf16.msra.mxu0 0
      %262 = vmatprep.mubr.bf16.mxu0 0
      %263 = vmatmul.mubr.bf16.gmra.mrb[0].mxu0 %v224
      %v264 = vpop.f32.mrb[0].mxu0
      %v265 = vadd.f32 0.0, %v264
      %v266 = vpop.f32.mrb[0].mxu0
      %v267 = vpop.f32.mrb[0].mxu0
      %v268 = vpop.f32.mrb[0].mxu0
      %269 = vdwg.mxu0
      %v270 = vld [vmem:[%s2] sm:$0xff]
      %272 = vset.pattern.permute.xlu0 0
      %273 = vperm.xlu0 %272, %v270
      %v274 = vpop.permute.xlu0 %273
      %v276 = vmul.f32 %v265, %v274
      %277 = vset.pattern.permute.xlu0 1
      %278 = vperm.xlu0 %277, %v270
      %v279 = vpop.permute.xlu0 %278
      %v281 = vadd.f32 %v276, %v279
      %v282 = vadd.f32 %v281, 3.0
      %v283 = vmax.f32 %v282, 0.0
      %v284 = vmin.f32 %v283, 6.0
      %v285 = vmul.f32 %v281, %v284
      %v286 = vmul.f32 %v285, 0.16666667
      %287 = vst [vmem:[%s199] sm:$0xff] %v286
      %p288 = scmp.lt.s32.totalorder %s18, 1
      %s289 = scalar_select %p288, %s18, 1
      %p290 = scmp.lt.s32.totalorder %s19, 0
      %s291 = scalar_select %p290, %s19, 0
      %s292 = sadd.s32 %s291, %s289
      %s293 = smul.addr %s292, 8
      %s294 = scalar_lea.vmem %s3, %s293
      // Predicated region
      $region33: #{std_conv_pallas.3} parent=31 // pred_check
        %p295 = pneg %p116
      $region34: #{std_conv_pallas.3} parent=31 // pred_check_branch
        %297 = sbr.rel (%p295) target = $region36
      $region35: #{std_conv_pallas.3} parent=31 // pred_region
        _
      $region36: #{std_conv_pallas.3} parent=31 // pred_fallthru
        _
    $region32: #{std_conv_pallas.3} parent=5 // pred_fallthru
      _
    %p298 = scmp.le.s32.totalorder 2, %s9
    // Predicated region
    $region37: #{std_conv_pallas.3} parent=5 // pred_check
      %p299 = pneg %p298
    $region38: #{std_conv_pallas.3} parent=5 // pred_check_branch
      %301 = sbr.rel (%p299) target = $region40
    $region39: #{std_conv_pallas.3} parent=5 // pred_region
      %s302 = ssub.s32 %s9, 2
      // Predicated region
      $region41: #{std_conv_pallas.3} parent=39 // pred_check
        %p303 = pneg %p122
      $region42: #{std_conv_pallas.3} parent=39 // pred_check_branch
        %305 = sbr.rel (%p303) target = $region44
      $region43: #{std_conv_pallas.3} parent=39 // pred_region
        %p306 = scmp.lt.s32.totalorder %s20, 1
        %s307 = scalar_select %p306, %s20, 1
        %p308 = scmp.lt.s32.totalorder %s21, 0
        %s309 = scalar_select %p308, %s21, 0
        %s310 = sadd.s32 %s309, %s307
        %s311 = smul.addr %s310, 8
        %s312 = scalar_lea.vmem %s3, %s311
      $region44: #{std_conv_pallas.3} parent=39 // pred_fallthru
        _
    $region40: #{std_conv_pallas.3} parent=5 // pred_fallthru
      _
  $region6: #{std_conv_pallas.3} parent=0 // loop_footer
    %s13 = sadd.s32 1, %s9
  $region7: #{std_conv_pallas.3} parent=0 // loop_footer_branch
    %8 = sbr.rel target = $region3
  $region8: #{std_conv_pallas.3} parent=0 // loop_exit
    _

// kernel: std_conv_pallas.2
$region0: #{std_conv_pallas.2}
  #allocation0 [shape = 'u32[]', space=smem, size = 0x4, offset = 0x4, fixed_abs, tag = 'smem constant byte address 0x4 - core index']
  #allocation1 [shape = 'u32[144,128]{1,0:T(1,128)}', space=vmem, size = 0x12000, scoped, tag = 'internal scratch']
  %s0 = inlined_call_operand.vmem [shape: bf16[2,36,128], index: 0, kind: input, shape index: {}]
  %s1 = inlined_call_operand.vmem [shape: bf16[8,36], index: 1, kind: input, shape index: {}]
  %s2 = inlined_call_operand.vmem [shape: f32[2,1,8,2], index: 2, kind: output, shape index: {}]
  %s3 = sld [smem:[#allocation0]]
  $region41: #{std_conv_pallas.2} parent=0
    _
  %s5 = ssub.s32 1, %s3
  %s6 = scalar_select 0, %s5, %s3
  loop: start=0, step=1, limit=4
  $region2: #{std_conv_pallas.2} parent=0 // loop_pre_header
    _
  $region3: #{std_conv_pallas.2} parent=0 // loop_header
    %s8 = sphi 0, %s12
    %p9 = scmp.ge.s32.totalorder %s8, 4
    %s15 = sphi 0, %s27
    %s16 = sphi 0, %s23
    %s17 = sphi 0, %s15
    %s18 = sphi 0, %s16
    %s19 = sphi 0, %s17
    %s20 = sphi 0, %s18
    %s32 = sphi 0, %s34
    %s35 = sphi 0, %s32
    %s36 = sphi 0, %s35
    %s52 = sphi 0, %s36
    %s56 = sphi 0, %s56
    %s58 = sphi 0, %s56
    %s59 = sphi 0, %s58
    %s73 = sphi 0, %s59
    %s81 = sphi 0, %s83
    %s84 = sphi 0, %s81
    %s85 = sphi 0, %s84
    %s101 = sphi 0, %s85
  $region4: #{std_conv_pallas.2} parent=0 // loop_header_branch
    %11 = sbr.rel (%p9) target = $region8
  $region5: #{std_conv_pallas.2} parent=0 // loop_body
    %s13 = ssub.s32 %s8, 1
    %s14 = ssub.s32 %s8, 2
    %s21 = sadd.s32 1, %s16
    %p22 = scmp.ge.s32.totalorder %s21, 1
    %s23 = scalar_select %p22, 0, %s21
    %s24 = sadd.s32 1, %s15
    %s25 = scalar_select %p22, %s24, %s15
    %p26 = scmp.ge.s32.totalorder %s25, 2
    %s27 = scalar_select %p26, 0, %s25
    %s28 = ssub.s32 %s15, %s27
    %s29 = ssub.s32 %s16, %s23
    %s30 = sor.u32 %s28, %s29
    %p31 = scmp.eq.s32.totalorder %s30, 0
    %s33 = sadd.s32 %s32, 1
    %s34 = scalar_select %p31, %s32, %s33
    %p37 = pneg %p31
    %p38 = scmp.eq.s32.totalorder %s8, 1
    %p39 = por %p37, %p38
    %p40 = scmp.ne.s32.totalorder %s32, %s35
    %p41 = scmp.eq.s32.totalorder %s8, 0
    %p42 = por %p40, %p41
    %p43 = scmp.ne.s32.totalorder %s32, %s35
    %p44 = scmp.eq.s32.totalorder %s13, 1
    %p45 = por %p43, %p44
    %p46 = scmp.ne.s32.totalorder %s35, %s36
    %p47 = scmp.eq.s32.totalorder %s13, 0
    %p48 = por %p46, %p47
    %p49 = scmp.ne.s32.totalorder %s35, %s36
    %p50 = scmp.eq.s32.totalorder %s14, 1
    %p51 = por %p49, %p50
    %p53 = scmp.ne.s32.totalorder %s36, %s52
    %p54 = scmp.eq.s32.totalorder %s14, 0
    %p55 = por %p53, %p54
    %s57 = sadd.s32 %s56, 1
    %p60 = scmp.eq.s32.totalorder %s8, 1
    %p61 = scmp.ne.s32.totalorder %s56, %s58
    %p62 = scmp.eq.s32.totalorder %s8, 0
    %p63 = por %p61, %p62
    %p64 = scmp.ne.s32.totalorder %s56, %s58
    %p65 = scmp.eq.s32.totalorder %s13, 1
    %p66 = por %p64, %p65
    %p67 = scmp.ne.s32.totalorder %s58, %s59
    %p68 = scmp.eq.s32.totalorder %s13, 0
    %p69 = por %p67, %p68
    %p70 = scmp.ne.s32.totalorder %s58, %s59
    %p71 = scmp.eq.s32.totalorder %s14, 1
    %p72 = por %p70, %p71
    %p74 = scmp.ne.s32.totalorder %s59, %s73
    %p75 = scmp.eq.s32.totalorder %s14, 0
    %p76 = por %p74, %p75
    %s77 = ssub.s32 %s15, %s27
    %s78 = ssub.s32 %s16, %s23
    %s79 = sor.u32 %s77, %s78
    %p80 = scmp.eq.s32.totalorder %s79, 0
    %s82 = sadd.s32 %s81, 1
    %s83 = scalar_select %p80, %s81, %s82
    %p86 = pneg %p80
    %p87 = scmp.eq.s32.totalorder %s8, 1
    %p88 = por %p86, %p87
    %p89 = scmp.ne.s32.totalorder %s81, %s84
    %p90 = scmp.eq.s32.totalorder %s8, 0
    %p91 = por %p89, %p90
    %p92 = scmp.ne.s32.totalorder %s81, %s84
    %p93 = scmp.eq.s32.totalorder %s13, 1
    %p94 = por %p92, %p93
    %p95 = scmp.ne.s32.totalorder %s84, %s85
    %p96 = scmp.eq.s32.totalorder %s13, 0
    %p97 = por %p95, %p96
    %p98 = scmp.ne.s32.totalorder %s84, %s85
    %p99 = scmp.eq.s32.totalorder %s14, 1
    %p100 = por %p98, %p99
    %p102 = scmp.ne.s32.totalorder %s85, %s101
    %p103 = scmp.eq.s32.totalorder %s14, 0
    %p104 = por %p102, %p103
    %p105 = scmp.le.s32.totalorder 1, %s8
    %p106 = scmp.lt.s32.totalorder %s8, 3
    %p107 = pnand %p105, %p106
    %p108 = pneg %p107
    // Predicated region
    $region9: #{std_conv_pallas.2} parent=5 // pred_check
      _
    $region10: #{std_conv_pallas.2} parent=5 // pred_check_branch
      %110 = sbr.rel (%p107) target = $region12
    $region11: #{std_conv_pallas.2} parent=5 // pred_region
      %s111 = ssub.s32 %s8, 1
      // Predicated region
      $region13: #{std_conv_pallas.2} parent=11 // pred_check
        %p112 = pneg %p69
      $region14: #{std_conv_pallas.2} parent=11 // pred_check_branch
        %114 = sbr.rel (%p112) target = $region16
      $region15: #{std_conv_pallas.2} parent=11 // pred_region
        _
      $region16: #{std_conv_pallas.2} parent=11 // pred_fallthru
        _
    $region12: #{std_conv_pallas.2} parent=5 // pred_fallthru
      _
    %p115 = scmp.lt.s32.totalorder %s8, 2
    // Predicated region
    $region17: #{std_conv_pallas.2} parent=5 // pred_check
      %p116 = pneg %p115
    $region18: #{std_conv_pallas.2} parent=5 // pred_check_branch
      %118 = sbr.rel (%p116) target = $region20
    $region19: #{std_conv_pallas.2} parent=5 // pred_region
      // Predicated region
      $region21: #{std_conv_pallas.2} parent=19 // pred_check
        %p119 = pneg %p42
      $region22: #{std_conv_pallas.2} parent=19 // pred_check_branch
        %121 = sbr.rel (%p119) target = $region24
      $region23: #{std_conv_pallas.2} parent=19 // pred_region
        %p122 = scmp.lt.s32.totalorder %s15, 1
        %s123 = scalar_select %p122, %s15, 1
        %p124 = scmp.lt.s32.totalorder %s16, 0
        %s125 = scalar_select %p124, %s16, 0
        %s126 = smul.addr %s123, 5
        %s127 = sadd.s32 %s125, %s126
        %s128 = smul.addr %s127, 4
        %s129 = scalar_lea.vmem %s0, %s128
      $region24: #{std_conv_pallas.2} parent=19 // pred_fallthru
        _
    $region20: #{std_conv_pallas.2} parent=5 // pred_fallthru
      _
    %p130 = scmp.le.s32.totalorder 1, %s8
    %p131 = scmp.lt.s32.totalorder %s8, 3
    %p132 = pnand %p130, %p131
    %p133 = pneg %p132
    // Predicated region
    $region25: #{std_conv_pallas.2} parent=5 // pred_check
      _
    $region26: #{std_conv_pallas.2} parent=5 // pred_check_branch
      %135 = sbr.rel (%p132) target = $region28
    $region27: #{std_conv_pallas.2} parent=5 // pred_region
      %s136 = ssub.s32 %s8, 1
      %p137 = scmp.lt.s32.totalorder %s17, 1
      %s138 = scalar_select %p137, %s17, 1
      %p139 = scmp.lt.s32.totalorder %s18, 0
      %s140 = scalar_select %p139, %s18, 0
      %s141 = smul.addr %s138, 5
      %s142 = sadd.s32 %s140, %s141
      %s143 = smul.addr %s142, 4
      %s144 = scalar_lea.vmem %s0, %s143
      %p145 = pneg %p48
      %p146 = pneg %p45
      %p147 = pneg %p69
      %p148 = pneg %p66
      %p149 = pneg %p97
      %p150 = pneg %p94
      %p151 = scmp.lt.s32.totalorder %s17, 1
      %s152 = scalar_select %p151, %s17, 1
      %p153 = scmp.lt.s32.totalorder %s18, 0
      %s154 = scalar_select %p153, %s18, 0
      %s155 = sadd.s32 %s154, %s152
      %s156 = smul.addr %s155, 8
      %s157 = scalar_lea.vmem %s2, %s156
      %p158 = scmp.lt.s32.totalorder %s17, 1
      %s159 = scalar_select %p158, %s17, 1
      %p160 = scmp.lt.s32.totalorder %s18, 0
      %s161 = scalar_select %p160, %s18, 0
      %s162 = smul.addr %s159, 5
      %s163 = sadd.s32 %s161, %s162
      %s164 = smul.addr %s163, 4
      %s165 = scalar_lea.vmem %s0, %s164
      %p166 = scmp.lt.s32.totalorder %s17, 1
      %s167 = scalar_select %p166, %s17, 1
      %p168 = scmp.lt.s32.totalorder %s18, 0
      %s169 = scalar_select %p168, %s18, 0
      %s170 = sadd.s32 %s169, %s167
      %s171 = smul.addr %s170, 8
      %s172 = scalar_lea.vmem %s2, %s171
      %v174 = vld [vmem:[%s1] sm:$0xf]
      %v175 = vld [vmem:[%s165] sm:$0xf]
      %v176 = vld [vmem:[%s165 + $0x4] sm:$0xf]
      %v177 = vld [vmem:[%s165 + $0x8] sm:$0xf]
      %v178 = vld [vmem:[%s165 + $0xc] sm:$0xf]
      %v179 = vld [vmem:[%s165 + $0x10] sm:$0x3]
      %v185 = vunpack.c.l.b16 %v175
      %v186 = vunpack.c.l.b16 %v176
      %v187 = vunpack.c.l.b16 %v177
      %v188 = vunpack.c.l.b16 %v178
      %v189 = vunpack.c.l.b16 %v179
      %v190 = vpack.c.b16 %v186, %v185
      %v191 = vpack.c.b16 %v188, %v187
      %v192 = vpack.c.b16 %v189, %v189
      %vm195 = vcmask 293888
      %v197 = vsel %vm195, %v174, 0
      %vm199 = vcmask 1041408
      %v201 = vsel %vm199, %v192, 0
      %203 = vmatprep.subr.bf16.mxu0 0
      %204 = vmatpush1.bf16.msra.mxu0 %v190
      %205 = vmatprep.subr.bf16.mxu0 0
      %206 = vmatpush1.bf16.msra.mxu0 %v191
      %207 = vmatprep.subr.bf16.mxu0 0
      %208 = vmatpush1.bf16.msra.mxu0 %v201
      %209 = vmatprep.subr.bf16.mxu0 0
      %210 = vmatpush1.bf16.msra.mxu0 0
      %211 = vmatprep.subr.bf16.mxu0 0
      %212 = vmatpush1.bf16.msra.mxu0 0
      %213 = vmatprep.subr.bf16.mxu0 0
      %214 = vmatpush1.bf16.msra.mxu0 0
      %215 = vmatprep.subr.bf16.mxu0 0
      %216 = vmatpush1.bf16.msra.mxu0 0
      %217 = vmatprep.subr.bf16.mxu0 0
      %218 = vmatpush1.bf16.msra.mxu0 0
      %219 = vmatprep.subr.bf16.mxu0 0
      %220 = vmatpush1.bf16.msra.mxu0 0
      %221 = vmatprep.subr.bf16.mxu0 0
      %222 = vmatpush1.bf16.msra.mxu0 0
      %223 = vmatprep.subr.bf16.mxu0 0
      %224 = vmatpush1.bf16.msra.mxu0 0
      %225 = vmatprep.subr.bf16.mxu0 0
      %226 = vmatpush1.bf16.msra.mxu0 0
      %227 = vmatprep.subr.bf16.mxu0 0
      %228 = vmatpush1.bf16.msra.mxu0 0
      %229 = vmatprep.subr.bf16.mxu0 0
      %230 = vmatpush1.bf16.msra.mxu0 0
      %231 = vmatprep.subr.bf16.mxu0 0
      %232 = vmatpush1.bf16.msra.mxu0 0
      %233 = vmatprep.subr.bf16.mxu0 0
      %234 = vmatpush1.bf16.msra.mxu0 0
      %235 = vmatprep.mubr.bf16.mxu0 0
      %236 = vmatmul.mubr.bf16.gmra.mrb[0].mxu0 %v197
      %v237 = vpop.f32.mrb[0].mxu0
      %v238 = vadd.f32 0.0, %v237
      %v239 = vpop.f32.mrb[0].mxu0
      %v240 = vpop.f32.mrb[0].mxu0
      %v241 = vpop.f32.mrb[0].mxu0
      %242 = vdwg.mxu0
      %243 = vadd.xlane.f32.xlu0 %v238
      %v244 = vpop.xlane.xlu0 %243
      %v245 = vmul.f32 %v238, %v238
      %246 = vadd.xlane.f32.xlu0 %v245
      %v247 = vpop.xlane.xlu0 %246
      %vm248 = vcmask 7168
      %v249 = vsel %vm248, %v244, %v247
      %vm250 = vcmask 15360
      %251 = vst.msk [vmem:[%s172] sm:$0xff] %vm250, %v249
      %p252 = scmp.lt.s32.totalorder %s17, 1
      %s253 = scalar_select %p252, %s17, 1
      %p254 = scmp.lt.s32.totalorder %s18, 0
      %s255 = scalar_select %p254, %s18, 0
      %s256 = sadd.s32 %s255, %s253
      %s257 = smul.addr %s256, 8
      %s258 = scalar_lea.vmem %s2, %s257
      // Predicated region
      $region29: #{std_conv_pallas.2} parent=27 // pred_check
        %p259 = pneg %p94
      $region30: #{std_conv_pallas.2} parent=27 // pred_check_branch
        %261 = sbr.rel (%p259) target = $region32
      $region31: #{std_conv_pallas.2} parent=27 // pred_region
        _
      $region32: #{std_conv_pallas.2} parent=27 // pred_fallthru
        _
    $region28: #{std_conv_pallas.2} parent=5 // pred_fallthru
      _
    %p262 = scmp.le.s32.totalorder 2, %s8
    // Predicated region
    $region33: #{std_conv_pallas.2} parent=5 // pred_check
      %p263 = pneg %p262
    $region34: #{std_conv_pallas.2} parent=5 // pred_check_branch
      %265 = sbr.rel (%p263) target = $region36
    $region35: #{std_conv_pallas.2} parent=5 // pred_region
      %s266 = ssub.s32 %s8, 2
      // Predicated region
      $region37: #{std_conv_pallas.2} parent=35 // pred_check
        %p267 = pneg %p100
      $region38: #{std_conv_pallas.2} parent=35 // pred_check_branch
        %269 = sbr.rel (%p267) target = $region40
      $region39: #{std_conv_pallas.2} parent=35 // pred_region
        %p270 = scmp.lt.s32.totalorder %s19, 1
        %s271 = scalar_select %p270, %s19, 1
        %p272 = scmp.lt.s32.totalorder %s20, 0
        %s273 = scalar_select %p272, %s20, 0
        %s274 = sadd.s32 %s273, %s271
        %s275 = smul.addr %s274, 8
        %s276 = scalar_lea.vmem %s2, %s275
      $region40: #{std_conv_pallas.2} parent=35 // pred_fallthru
        _
    $region36: #{std_conv_pallas.2} parent=5 // pred_fallthru
      _
  $region6: #{std_conv_pallas.2} parent=0 // loop_footer
    %s12 = sadd.s32 1, %s8
  $region7: #{std_conv_pallas.2} parent=0 // loop_footer_branch
    %7 = sbr.rel target = $region3
  $region8: #{std_conv_pallas.2} parent=0 // loop_exit
    _

</llo_original>
